<compile_context>
chip_gen: v7x
topology: tpu7x:2x2x1
jax: 0.10.0
libtpu: 0.0.40
codegen_flags: <defaults>
</compile_context>

<pallas_src>
import functools

import jax
import jax.numpy as jnp
from jax.experimental import pallas as pl
from jax.experimental.pallas import tpu as pltpu

_REF_PREC = jax.lax.Precision.HIGHEST  # reference only; kernels use bf16 MXU operands


def _round_up(x, m):
    return (x + m - 1) // m * m


def _tpu_vmem_capacity():
    try:
        info = pltpu.get_tpu_info()
        cap = getattr(info, "vmem_capacity_bytes", None)
        if cap:
            return int(cap)
    except Exception:
        pass
    return 64 * 1024 * 1024  # conservative (v7x-sized VMEM)


_VMEM_CAP = _tpu_vmem_capacity()
# v5e/v6e (128 MiB physical) can spend up to 96 MiB; on v7x stay under 48 MiB.
_VMEM_LIMIT_CAP = (96 if _VMEM_CAP >= 100 * 1024 * 1024 else 48) * 1024 * 1024


def _mosaic_params(tile_bytes):
    limit = int(min(_VMEM_LIMIT_CAP, max(32 * 1024 * 1024, 3 * tile_bytes)))
    return pltpu.CompilerParams(
        dimension_semantics=("parallel",), vmem_limit_bytes=limit)


def _pick_tile(total, tile_max):
    # Biggest tile <= tile_max, multiple of 8, and (when possible) at least 2 grid
    # steps so v7x's two TensorCores both get work.
    half = _round_up((total + 1) // 2, 8)
    return max(8, min(tile_max, half, _round_up(total, 8)))


# ----------------------------- 1x1 (pointwise) conv -----------------------------

def _pointwise_kernel(x_ref, w_ref, b_ref, o_ref):
    # x row tile cast to bf16 in-kernel; weight arrives pre-transposed & bf16.
    acc = jnp.dot(x_ref[...].astype(jnp.bfloat16), w_ref[...],
                  preferred_element_type=jnp.float32)
    acc = acc + b_ref[...].astype(jnp.float32)
    o_ref[...] = acc.astype(o_ref.dtype)


def pointwise_conv(x2d, w_t_bf16, b, *, tm_max=None):
    """1x1 conv as a row-tiled matmul: (M, Cin) @ (Cin, Cout) + b."""
    M, Cin = x2d.shape
    Cout = w_t_bf16.shape[1]
    if tm_max is None:
        tm_max = 512 if _VMEM_CAP >= 100 * 1024 * 1024 else 256
    tm = _pick_tile(M, tm_max)
    Mp = _round_up(M, tm)
    if Mp != M:
        x2d = jnp.pad(x2d, ((0, Mp - M), (0, 0)))
    itemsize = jnp.dtype(x2d.dtype).itemsize
    tile_bytes = tm * Cin * itemsize + tm * Cout * itemsize + Cin * Cout * 2 + Cout * 4
    out = pl.pallas_call(
        _pointwise_kernel,
        out_shape=jax.ShapeDtypeStruct((Mp, Cout), x2d.dtype),
        grid_spec=pltpu.PrefetchScalarGridSpec(
            num_scalar_prefetch=0,
            grid=(Mp // tm,),
            in_specs=[
                pl.BlockSpec((tm, Cin), lambda i: (i, 0)),    # activation row tile
                pl.BlockSpec((Cin, Cout), lambda i: (0, 0)),  # weight (pre-transposed, bf16)
                pl.BlockSpec((1, Cout), lambda i: (0, 0)),    # bias
            ],
            out_specs=pl.BlockSpec((tm, Cout), lambda i: (i, 0)),
        ),
        compiler_params=_mosaic_params(tile_bytes),
    )(x2d, w_t_bf16, b.reshape(1, Cout))
    return out[:M] if Mp != M else out


# ------------------------ fused double depthwise 3x3 conv ------------------------

def _dw3x3_pair_kernel(x_ref, w2_ref, b2_ref, w3_ref, b3_ref, o_ref, *, H, W):
    # x_ref block: (1, H+4, W+4, C) -- input zero-padded by 2 (once, in the wrapper).
    xp = x_ref[0].astype(jnp.float32)               # (H+4, W+4, C)
    C = xp.shape[-1]
    w2 = w2_ref[...].astype(jnp.float32)            # (9, C)
    w3 = w3_ref[...].astype(jnp.float32)

    # first depthwise 3x3 (padding=1), computed "valid" over the 2-padded block
    y = jnp.zeros((H + 2, W + 2, C), jnp.float32)
    for di in range(3):
        for dj in range(3):
            tap = xp[di:di + H + 2, dj:dj + W + 2, :]
            wk = w2[3 * di + dj:3 * di + dj + 1, :].reshape(1, 1, C)
            y = y + tap * wk

    # keep only the true HxW interior (+bias); the surrounding 1-ring must be exactly
    # zero, matching PyTorch's zero padding of the intermediate activation.
    row = jax.lax.broadcasted_iota(jnp.int32, (H + 2, W + 2, C), 0)
    col = jax.lax.broadcasted_iota(jnp.int32, (H + 2, W + 2, C), 1)
    interior = (row >= 1) & (row <= H) & (col >= 1) & (col <= W)
    y = jnp.where(interior, y + b2_ref[...].astype(jnp.float32).reshape(1, 1, C), 0.0)

    # second depthwise 3x3 (padding=1), "valid" over the masked intermediate
    z = jnp.zeros((H, W, C), jnp.float32)
    for di in range(3):
        for dj in range(3):
            tap = y[di:di + H, dj:dj + W, :]
            wk = w3[3 * di + dj:3 * di + dj + 1, :].reshape(1, 1, C)
            z = z + tap * wk
    z = z + b3_ref[...].astype(jnp.float32).reshape(1, 1, C)
    o_ref[0] = z.astype(o_ref.dtype)


def fused_depthwise3x3_pair(x, w2, b2, w3, b3):
    """Two chained depthwise 3x3 convs (each padding=1) fused into one kernel.

    x: (n, H, W, C) channels-last, w*: (C, 3, 3), b*: (C,).
    """
    n, H, W, C = x.shape
    # TODO(synk): fold this pad (and the q1 1x1 matmul) into the kernel to drop the
    # remaining extra HBM pass, and H-tile with halos for very large feature maps
    # (one image per grid step keeps halo handling trivial and fits typical VMEM).
    xp = jnp.pad(x, ((0, 0), (2, 2), (2, 2), (0, 0)))
    w2f = jnp.transpose(w2, (1, 2, 0)).reshape(9, C)   # [3*di+dj, c]
    w3f = jnp.transpose(w3, (1, 2, 0)).reshape(9, C)
    itemsize = jnp.dtype(x.dtype).itemsize
    tile_bytes = ((H + 4) * (W + 4) * C + H * W * C) * itemsize \
        + 4 * (H + 2) * (W + 2) * C * 4 + 20 * C * 4
    kernel = functools.partial(_dw3x3_pair_kernel, H=H, W=W)
    return pl.pallas_call(
        kernel,
        out_shape=jax.ShapeDtypeStruct((n, H, W, C), x.dtype),
        grid_spec=pltpu.PrefetchScalarGridSpec(
            num_scalar_prefetch=0,
            grid=(n,),
            in_specs=[
                pl.BlockSpec((1, H + 4, W + 4, C), lambda i: (i, 0, 0, 0)),
                pl.BlockSpec((9, C), lambda i: (0, 0)),
                pl.BlockSpec((1, C), lambda i: (0, 0)),
                pl.BlockSpec((9, C), lambda i: (0, 0)),
                pl.BlockSpec((1, C), lambda i: (0, 0)),
            ],
            out_specs=pl.BlockSpec((1, H, W, C), lambda i: (i, 0, 0, 0)),
        ),
        compiler_params=_mosaic_params(tile_bytes),
    )(xp, w2f, b2.reshape(1, C), w3f, b3.reshape(1, C))


# ----------------------------- normalized attention ------------------------------

def _attention_kernel(fac_ref, q_ref, k_ref, v_ref, o_ref):
    q = q_ref[...].astype(jnp.float32)   # (tb, W, dh)
    k = k_ref[...].astype(jnp.float32)
    # F.normalize(dim=-1): x * rsqrt(max(sum(x^2), eps^2)) == x / max(||x||, 1e-12)
    qn = q * jax.lax.rsqrt(jnp.maximum(jnp.sum(q * q, axis=-1, keepdims=True), 1e-24))
    kn = k * jax.lax.rsqrt(jnp.maximum(jnp.sum(k * k, axis=-1, keepdims=True), 1e-24))
    # fold the scalar fac into q (linear in the scores), then bf16 for the MXU
    qn = (qn * fac_ref[0]).astype(jnp.bfloat16)
    kn = kn.astype(jnp.bfloat16)
    s = jnp.einsum('bqd,bkd->bqk', qn, kn, preferred_element_type=jnp.float32)
    s = s - jnp.max(s, axis=-1, keepdims=True)
    p = jnp.exp(s)
    p = p * pl.reciprocal(jnp.sum(p, axis=-1, keepdims=True), approx=True)
    out = jnp.einsum('bqk,bkd->bqd', p.astype(jnp.bfloat16),
                     v_ref[...].astype(jnp.bfloat16),
                     preferred_element_type=jnp.float32)
    # TODO(synk): repack the output lane-dense ((tb, W*dh) or heads merged onto lanes)
    # when dh << 128 to avoid masked vst on the store side.
    o_ref[...] = out.astype(o_ref.dtype)


def attention(q, k, v, fac, *, tb_max=128):
    Bt, W, dh = q.shape
    tb = _pick_tile(Bt, tb_max)
    Bp = _round_up(Bt, tb)
    if Bp != Bt:
        pad = ((0, Bp - Bt), (0, 0), (0, 0))
        q, k, v = jnp.pad(q, pad), jnp.pad(k, pad), jnp.pad(v, pad)
    fac_arr = jnp.asarray(fac, jnp.float32).reshape(1)
    itemsize = jnp.dtype(q.dtype).itemsize
    tile_bytes = 4 * tb * W * dh * itemsize + 2 * tb * W * W * 4
    out = pl.pallas_call(
        _attention_kernel,
        out_shape=jax.ShapeDtypeStruct((Bp, W, dh), q.dtype),
        grid_spec=pltpu.PrefetchScalarGridSpec(
            num_scalar_prefetch=0,
            grid=(Bp // tb,),
            in_specs=[
                pl.BlockSpec(memory_space=pltpu.MemorySpace.SMEM),  # fac scalar
                pl.BlockSpec((tb, W, dh), lambda i: (i, 0, 0)),     # q
                pl.BlockSpec((tb, W, dh), lambda i: (i, 0, 0)),     # k
                pl.BlockSpec((tb, W, dh), lambda i: (i, 0, 0)),     # v
            ],
            out_specs=pl.BlockSpec((tb, W, dh), lambda i: (i, 0, 0)),
        ),
        compiler_params=_mosaic_params(tile_bytes),
    )(fac_arr, q, k, v)
    return out[:Bt] if Bp != Bt else out


# ----------------------------- full module forward --------------------------------

def next_attention_impl_z(x, params, num_heads):
    """Pallas forward of NextAttentionImplZ.  x: (n, c, h, w) NCHW (PyTorch layout)."""
    n, c, h, w = x.shape
    dh = c // num_heads
    c3 = 3 * c

    # 1x1 weights: pre-transpose + pre-cast to bf16 once (single-pass MXU operands)
    w1_t = jnp.transpose(params['w1']).astype(jnp.bfloat16)      # (c, 3c)
    wfin_t = jnp.transpose(params['wfin']).astype(jnp.bfloat16)  # (c, c)

    # q1: 1x1 conv (c -> 3c), channels-last matmul
    xl = jnp.transpose(x, (0, 2, 3, 1)).reshape(n * h * w, c)
    qkv = pointwise_conv(xl, w1_t, params['b1']).reshape(n, h, w, c3)

    # q2 + q3: the two depthwise 3x3 convs, fused in one kernel
    qkv = fused_depthwise3x3_pair(qkv, params['w2'], params['b2'],
                                  params['w3'], params['b3'])

    # single layout shuffle: (n,h,w,3c) -> (3, n, nh, h, w, dh), then q/k/v are views
    t = qkv.reshape(n, h, w, 3, num_heads, dh)
    t = jnp.transpose(t, (3, 0, 4, 1, 2, 5))
    q = t[0].reshape(n * num_heads * h, w, dh)
    k = t[1].reshape(n * num_heads * h, w, dh)
    v = t[2].reshape(n * num_heads * h, w, dh)

    res = attention(q, k, v, params['fac'])

    # reverse shuffle: (n nh h) w dh -> rows (n h w) x channels (nh dh), then fin 1x1
    res = res.reshape(n, num_heads, h, w, dh)
    res = jnp.transpose(res, (0, 2, 3, 1, 4)).reshape(n * h * w, c)
    res = pointwise_conv(res, wfin_t, params['bfin']).reshape(n, h, w, c)
    return jnp.transpose(res, (0, 3, 1, 2))


# ----------------------------- pure-JAX reference ---------------------------------

def next_attention_impl_z_ref(x, params, num_heads):
    n, c, h, w = x.shape
    dh = c // num_heads

    def conv1x1(t, wt, b):
        return jnp.einsum('nchw,oc->nohw', t, wt, precision=_REF_PREC) + b[None, :, None, None]

    def dwconv3x3(t, wt, b):
        H, W = t.shape[2], t.shape[3]
        tp = jnp.pad(t, ((0, 0), (0, 0), (1, 1), (1, 1)))
        out = jnp.zeros_like(t)
        for di in range(3):
            for dj in range(3):
                out = out + tp[:, :, di:di + H, dj:dj + W] * wt[None, :, di, dj, None, None]
        return out + b[None, :, None, None]

    qkv = conv1x1(x, params['w1'], params['b1'])
    qkv = dwconv3x3(qkv, params['w2'], params['b2'])
    qkv = dwconv3x3(qkv, params['w3'], params['b3'])
    q, k, v = jnp.split(qkv, 3, axis=1)

    def reshape(t):
        t = t.reshape(n, num_heads, dh, h, w)
        t = jnp.transpose(t, (0, 1, 3, 4, 2))
        return t.reshape(n * num_heads * h, w, dh)

    q, k, v = reshape(q), reshape(k), reshape(v)

    def l2norm(t):
        nrm = jnp.sqrt(jnp.sum(t * t, axis=-1, keepdims=True))
        return t / jnp.maximum(nrm, 1e-12)

    q, k = l2norm(q), l2norm(k)
    s = jnp.einsum('bqd,bkd->bqk', q, k, precision=_REF_PREC) * params['fac']
    attn = jax.nn.softmax(s, axis=-1)
    res = jnp.einsum('bqk,bkd->bqd', attn, v, precision=_REF_PREC)
    res = res.reshape(n, num_heads, h, w, dh)
    res = jnp.transpose(res, (0, 1, 4, 2, 3)).reshape(n, c, h, w)
    return conv1x1(res, params['wfin'], params['bfin'])


if __name__ == "__main__":
    n, c, h, w = 2, 8, 16, 16     # batch=2, num_dims=8, spatial 16x16
    num_heads = 2                 # dim_head = 4
    c3 = 3 * c

    key = jax.random.PRNGKey(0)
    ks = jax.random.split(key, 9)
    x = jax.random.normal(ks[0], (n, c, h, w), jnp.float32)

    s = 0.2
    params = {
        'w1':   s * jax.random.normal(ks[1], (c3, c), jnp.float32),     # Conv2d(c, 3c, 1)
        'b1':   s * jax.random.normal(ks[2], (c3,), jnp.float32),
        'w2':   s * jax.random.normal(ks[3], (c3, 3, 3), jnp.float32),  # depthwise 3x3
        'b2':   s * jax.random.normal(ks[4], (c3,), jnp.float32),
        'w3':   s * jax.random.normal(ks[5], (c3, 3, 3), jnp.float32),  # depthwise 3x3
        'b3':   s * jax.random.normal(ks[6], (c3,), jnp.float32),
        'fac':  jnp.float32(1.3),                                       # scalar nn.Parameter
        'wfin': s * jax.random.normal(ks[7], (c, c), jnp.float32),      # Conv2d(c, c, 1)
        'bfin': s * jax.random.normal(ks[8], (c,), jnp.float32),
    }

    out = next_attention_impl_z(x, params, num_heads)
    out = jax.block_until_ready(out)
    ref = next_attention_impl_z_ref(x, params, num_heads)

    assert out.shape == (n, c, h, w)
    max_err = float(jnp.max(jnp.abs(out - ref)))
    # bf16 MXU operands (single-pass) => compare against the f32 reference at ~1e-2 level
    assert jnp.allclose(out, ref, atol=3e-2, rtol=3e-2), f"max abs err {max_err}"
    print("KERNEL_OK")
</pallas_src>

<mosaic_0001>
module attributes {stable_mosaic.version = 11 : i64} {
  func.func @_pointwise_kernel(%arg0: i32, %arg1: memref<256x8xf32, #tpu.memory_space<vmem>>, %arg2: memref<8x24xbf16, #tpu.memory_space<vmem>>, %arg3: memref<1x24xf32, #tpu.memory_space<vmem>>, %arg4: memref<256x24xf32, #tpu.memory_space<vmem>>) attributes {dimension_semantics = [#tpu.dimension_semantics<parallel>], iteration_bounds = array<i64: 2>, scalar_prefetch = 0 : i64, scratch_operands = 0 : i64, tpu.core_type = #tpu.core_type<tc>, window_params = [{transform_indices = @transform_0, window_bounds = array<i64: 256, 8>}, {pipeline_mode = #tpu.pipeline_mode<synchronous>, transform_indices = @transform_1, window_bounds = array<i64: 8, 24>}, {pipeline_mode = #tpu.pipeline_mode<synchronous>, transform_indices = @transform_2, window_bounds = array<i64: 1, 24>}, {transform_indices = @transform_3, window_bounds = array<i64: 256, 24>}]} {
    %c0 = arith.constant 0 : index
    %c0_0 = arith.constant 0 : index
    %0 = vector.load %arg1[%c0, %c0_0] : memref<256x8xf32, #tpu.memory_space<vmem>>, vector<256x8xf32>
    %1 = arith.truncf %0 : vector<256x8xf32> to vector<256x8xbf16>
    %c0_1 = arith.constant 0 : index
    %c0_2 = arith.constant 0 : index
    %2 = vector.load %arg2[%c0_1, %c0_2] : memref<8x24xbf16, #tpu.memory_space<vmem>>, vector<8x24xbf16>
    %cst = arith.constant dense<0.000000e+00> : vector<256x24xf32>
    %3 = tpu.matmul %1, %2, %cst {dimension_numbers = #tpu.dot_dimension_numbers<[1], [0], [0], [1], [0, 0, 1, 1], [], []>} : vector<256x8xbf16>, vector<8x24xbf16>, vector<256x24xf32> -> vector<256x24xf32>
    %c0_3 = arith.constant 0 : index
    %c0_4 = arith.constant 0 : index
    %4 = vector.load %arg3[%c0_3, %c0_4] : memref<1x24xf32, #tpu.memory_space<vmem>>, vector<1x24xf32>
    %5 = vector.broadcast %4 : vector<1x24xf32> to vector<256x24xf32>
    %6 = arith.addf %3, %5 : vector<256x24xf32>
    %c0_5 = arith.constant 0 : index
    %c0_6 = arith.constant 0 : index
    %7 = vector.load %arg4[%c0_5, %c0_6] : memref<256x24xf32, #tpu.memory_space<vmem>>, vector<256x24xf32>
    tpu.vector_store %arg4[%c0_5, %c0_6], %6 {strides = array<i32>} : memref<256x24xf32, #tpu.memory_space<vmem>>, vector<256x24xf32>,
    return
  }
  func.func @transform_0(%arg0: i32) -> (i32, i32) {
    %c0_i32 = arith.constant 0 : i32
    %c0_i32_0 = arith.constant 0 : i32
    return %arg0, %c0_i32 : i32, i32
  }
  func.func @transform_1(%arg0: i32) -> (i32, i32) {
    %c0_i32 = arith.constant 0 : i32
    %c0_i32_0 = arith.constant 0 : i32
    %c0_i32_1 = arith.constant 0 : i32
    return %c0_i32, %c0_i32_0 : i32, i32
  }
  func.func @transform_2(%arg0: i32) -> (i32, i32) {
    %c0_i32 = arith.constant 0 : i32
    %c0_i32_0 = arith.constant 0 : i32
    %c0_i32_1 = arith.constant 0 : i32
    return %c0_i32, %c0_i32_0 : i32, i32
  }
  func.func @transform_3(%arg0: i32) -> (i32, i32) {
    %c0_i32 = arith.constant 0 : i32
    %c0_i32_0 = arith.constant 0 : i32
    return %arg0, %c0_i32 : i32, i32
  }
}

</mosaic_0001>

<llo_original>
// kernel: tpu_custom_call.1
$region0: #{tpu_custom_call.1}
  #allocation0 [shape = 'u32[]', space=smem, size = 0x4, offset = 0x4, fixed_abs, tag = 'smem constant byte address 0x4 - core index']
  #allocation1 [shape = 'u32[144,128]{1,0:T(1,128)}', space=vmem, size = 0x12000, scoped, tag = 'internal scratch']
  %s0 = inlined_call_operand.vmem [shape: f32[512,8], index: 0, kind: input, shape index: {}]
  %s1 = inlined_call_operand.vmem [shape: bf16[8,24], index: 1, kind: input, shape index: {}]
  %s2 = inlined_call_operand.vmem [shape: f32[1,24], index: 2, kind: input, shape index: {}]
  %s3 = inlined_call_operand.vmem [shape: f32[512,24], index: 3, kind: output, shape index: {}]
  %s4 = sld [smem:[#allocation0]]
  $region45: #{tpu_custom_call.1} parent=0
    _
  %s6 = ssub.s32 1, %s4
  %s7 = scalar_select 0, %s6, %s4
  loop: start=0, step=1, limit=4
  $region2: #{tpu_custom_call.1} parent=0 // loop_pre_header
    _
  $region3: #{tpu_custom_call.1} parent=0 // loop_header
    %s9 = sphi 0, %s13
    %p10 = scmp.ge.s32.totalorder %s9, 4
    %s19 = sphi 0, %s21
    %s22 = sphi 0, %s19
    %s23 = sphi 0, %s22
    %s39 = sphi 0, %s23
    %s43 = sphi 0, %s43
    %s45 = sphi 0, %s43
    %s46 = sphi 0, %s45
    %s60 = sphi 0, %s46
    %s64 = sphi 0, %s64
    %s66 = sphi 0, %s64
    %s67 = sphi 0, %s66
    %s81 = sphi 0, %s67
    %s87 = sphi 0, %s89
    %s90 = sphi 0, %s87
    %s91 = sphi 0, %s90
    %s107 = sphi 0, %s91
  $region4: #{tpu_custom_call.1} parent=0 // loop_header_branch
    %12 = sbr.rel (%p10) target = $region8
  $region5: #{tpu_custom_call.1} parent=0 // loop_body
    %s14 = ssub.s32 %s9, 1
    %s15 = ssub.s32 %s9, 2
    %s16 = sadd.s32 %s9, 1
    %s17 = ssub.s32 %s9, %s16
    %p18 = scmp.eq.s32.totalorder %s17, 0
    %s20 = sadd.s32 %s19, 1
    %s21 = scalar_select %p18, %s19, %s20
    %p24 = pneg %p18
    %p25 = scmp.eq.s32.totalorder %s9, 1
    %p26 = por %p24, %p25
    %p27 = scmp.ne.s32.totalorder %s19, %s22
    %p28 = scmp.eq.s32.totalorder %s9, 0
    %p29 = por %p27, %p28
    %p30 = scmp.ne.s32.totalorder %s19, %s22
    %p31 = scmp.eq.s32.totalorder %s14, 1
    %p32 = por %p30, %p31
    %p33 = scmp.ne.s32.totalorder %s22, %s23
    %p34 = scmp.eq.s32.totalorder %s14, 0
    %p35 = por %p33, %p34
    %p36 = scmp.ne.s32.totalorder %s22, %s23
    %p37 = scmp.eq.s32.totalorder %s15, 1
    %p38 = por %p36, %p37
    %p40 = scmp.ne.s32.totalorder %s23, %s39
    %p41 = scmp.eq.s32.totalorder %s15, 0
    %p42 = por %p40, %p41
    %s44 = sadd.s32 %s43, 1
    %p47 = scmp.eq.s32.totalorder %s9, 1
    %p48 = scmp.ne.s32.totalorder %s43, %s45
    %p49 = scmp.eq.s32.totalorder %s9, 0
    %p50 = por %p48, %p49
    %p51 = scmp.ne.s32.totalorder %s43, %s45
    %p52 = scmp.eq.s32.totalorder %s14, 1
    %p53 = por %p51, %p52
    %p54 = scmp.ne.s32.totalorder %s45, %s46
    %p55 = scmp.eq.s32.totalorder %s14, 0
    %p56 = por %p54, %p55
    %p57 = scmp.ne.s32.totalorder %s45, %s46
    %p58 = scmp.eq.s32.totalorder %s15, 1
    %p59 = por %p57, %p58
    %p61 = scmp.ne.s32.totalorder %s46, %s60
    %p62 = scmp.eq.s32.totalorder %s15, 0
    %p63 = por %p61, %p62
    %s65 = sadd.s32 %s64, 1
    %p68 = scmp.eq.s32.totalorder %s9, 1
    %p69 = scmp.ne.s32.totalorder %s64, %s66
    %p70 = scmp.eq.s32.totalorder %s9, 0
    %p71 = por %p69, %p70
    %p72 = scmp.ne.s32.totalorder %s64, %s66
    %p73 = scmp.eq.s32.totalorder %s14, 1
    %p74 = por %p72, %p73
    %p75 = scmp.ne.s32.totalorder %s66, %s67
    %p76 = scmp.eq.s32.totalorder %s14, 0
    %p77 = por %p75, %p76
    %p78 = scmp.ne.s32.totalorder %s66, %s67
    %p79 = scmp.eq.s32.totalorder %s15, 1
    %p80 = por %p78, %p79
    %p82 = scmp.ne.s32.totalorder %s67, %s81
    %p83 = scmp.eq.s32.totalorder %s15, 0
    %p84 = por %p82, %p83
    %s85 = ssub.s32 %s9, %s16
    %p86 = scmp.eq.s32.totalorder %s85, 0
    %s88 = sadd.s32 %s87, 1
    %s89 = scalar_select %p86, %s87, %s88
    %p92 = pneg %p86
    %p93 = scmp.eq.s32.totalorder %s9, 1
    %p94 = por %p92, %p93
    %p95 = scmp.ne.s32.totalorder %s87, %s90
    %p96 = scmp.eq.s32.totalorder %s9, 0
    %p97 = por %p95, %p96
    %p98 = scmp.ne.s32.totalorder %s87, %s90
    %p99 = scmp.eq.s32.totalorder %s14, 1
    %p100 = por %p98, %p99
    %p101 = scmp.ne.s32.totalorder %s90, %s91
    %p102 = scmp.eq.s32.totalorder %s14, 0
    %p103 = por %p101, %p102
    %p104 = scmp.ne.s32.totalorder %s90, %s91
    %p105 = scmp.eq.s32.totalorder %s15, 1
    %p106 = por %p104, %p105
    %p108 = scmp.ne.s32.totalorder %s91, %s107
    %p109 = scmp.eq.s32.totalorder %s15, 0
    %p110 = por %p108, %p109
    %p111 = scmp.le.s32.totalorder 1, %s9
    %p112 = scmp.lt.s32.totalorder %s9, 3
    %p113 = pnand %p111, %p112
    %p114 = pneg %p113
    // Predicated region
    $region9: #{tpu_custom_call.1} parent=5 // pred_check
      _
    $region10: #{tpu_custom_call.1} parent=5 // pred_check_branch
      %116 = sbr.rel (%p113) target = $region12
    $region11: #{tpu_custom_call.1} parent=5 // pred_region
      %s117 = ssub.s32 %s9, 1
      // Predicated region
      $region13: #{tpu_custom_call.1} parent=11 // pred_check
        %p118 = pneg %p56
      $region14: #{tpu_custom_call.1} parent=11 // pred_check_branch
        %120 = sbr.rel (%p118) target = $region16
      $region15: #{tpu_custom_call.1} parent=11 // pred_region
        _
      $region16: #{tpu_custom_call.1} parent=11 // pred_fallthru
        _
      // Predicated region
      $region17: #{tpu_custom_call.1} parent=11 // pred_check
        %p121 = pneg %p77
      $region18: #{tpu_custom_call.1} parent=11 // pred_check_branch
        %123 = sbr.rel (%p121) target = $region20
      $region19: #{tpu_custom_call.1} parent=11 // pred_region
        _
      $region20: #{tpu_custom_call.1} parent=11 // pred_fallthru
        _
    $region12: #{tpu_custom_call.1} parent=5 // pred_fallthru
      _
    %p124 = scmp.lt.s32.totalorder %s9, 2
    // Predicated region
    $region21: #{tpu_custom_call.1} parent=5 // pred_check
      %p125 = pneg %p124
    $region22: #{tpu_custom_call.1} parent=5 // pred_check_branch
      %127 = sbr.rel (%p125) target = $region24
    $region23: #{tpu_custom_call.1} parent=5 // pred_region
      // Predicated region
      $region25: #{tpu_custom_call.1} parent=23 // pred_check
        %p128 = pneg %p29
      $region26: #{tpu_custom_call.1} parent=23 // pred_check_branch
        %130 = sbr.rel (%p128) target = $region28
      $region27: #{tpu_custom_call.1} parent=23 // pred_region
        %s131 = smul.u32 32, %s9
        %p132 = scmp.lt.s32.totalorder %s131, 63
        %s133 = scalar_select %p132, %s131, 63
        %s134 = smul.addr %s133, 8
        %s135 = scalar_lea.vmem %s0, %s134
        %s136 = smul.u32 32, %s9
      $region28: #{tpu_custom_call.1} parent=23 // pred_fallthru
        _
    $region24: #{tpu_custom_call.1} parent=5 // pred_fallthru
      _
    %p137 = scmp.le.s32.totalorder 1, %s9
    %p138 = scmp.lt.s32.totalorder %s9, 3
    %p139 = pnand %p137, %p138
    %p140 = pneg %p139
    // Predicated region
    $region29: #{tpu_custom_call.1} parent=5 // pred_check
      _
    $region30: #{tpu_custom_call.1} parent=5 // pred_check_branch
      %142 = sbr.rel (%p139) target = $region32
    $region31: #{tpu_custom_call.1} parent=5 // pred_region
      %s143 = ssub.s32 %s9, 1
      %s144 = smul.u32 32, %s14
      %p145 = scmp.lt.s32.totalorder %s144, 63
      %s146 = scalar_select %p145, %s144, 63
      %s147 = smul.addr %s146, 8
      %s148 = scalar_lea.vmem %s0, %s147
      %p149 = pneg %p35
      %p150 = pneg %p32
      %p151 = pneg %p56
      %p152 = pneg %p53
      %p153 = pneg %p77
      %p154 = pneg %p74
      %p155 = pneg %p103
      %p156 = pneg %p100
      %s157 = smul.u32 32, %s14
      %p158 = scmp.lt.s32.totalorder %s157, 63
      %s159 = scalar_select %p158, %s157, 63
      %s160 = smul.addr %s159, 8
      %s161 = scalar_lea.vmem %s3, %s160
      %s162 = smul.u32 32, %s14
      %p163 = scmp.lt.s32.totalorder %s162, 63
      %s164 = scalar_select %p163, %s162, 63
      %s165 = smul.addr %s164, 8
      %s166 = scalar_lea.vmem %s0, %s165
      %s167 = smul.u32 32, %s14
      %s168 = smul.u32 32, %s14
      %p169 = scmp.lt.s32.totalorder %s168, 63
      %s170 = scalar_select %p169, %s168, 63
      %s171 = smul.addr %s170, 8
      %s172 = scalar_lea.vmem %s3, %s171
      %s173 = smul.u32 32, %s14
      %v175 = vld [vmem:[%s166] sm:$0xff]
      %v176 = vld [vmem:[%s166 + $0x8] sm:$0xff]
      %v177 = vld [vmem:[%s166 + $0x10] sm:$0xff]
      %v178 = vld [vmem:[%s166 + $0x18] sm:$0xff]
      %v179 = vld [vmem:[%s166 + $0x20] sm:$0xff]
      %v180 = vld [vmem:[%s166 + $0x28] sm:$0xff]
      %v181 = vld [vmem:[%s166 + $0x30] sm:$0xff]
      %v182 = vld [vmem:[%s166 + $0x38] sm:$0xff]
      %v183 = vld [vmem:[%s166 + $0x40] sm:$0xff]
      %v184 = vld [vmem:[%s166 + $0x48] sm:$0xff]
      %v185 = vld [vmem:[%s166 + $0x50] sm:$0xff]
      %v186 = vld [vmem:[%s166 + $0x58] sm:$0xff]
      %v187 = vld [vmem:[%s166 + $0x60] sm:$0xff]
      %v188 = vld [vmem:[%s166 + $0x68] sm:$0xff]
      %v189 = vld [vmem:[%s166 + $0x70] sm:$0xff]
      %v190 = vld [vmem:[%s166 + $0x78] sm:$0xff]
      %v191 = vld [vmem:[%s166 + $0x80] sm:$0xff]
      %v192 = vld [vmem:[%s166 + $0x88] sm:$0xff]
      %v193 = vld [vmem:[%s166 + $0x90] sm:$0xff]
      %v194 = vld [vmem:[%s166 + $0x98] sm:$0xff]
      %v195 = vld [vmem:[%s166 + $0xa0] sm:$0xff]
      %v196 = vld [vmem:[%s166 + $0xa8] sm:$0xff]
      %v197 = vld [vmem:[%s166 + $0xb0] sm:$0xff]
      %v198 = vld [vmem:[%s166 + $0xb8] sm:$0xff]
      %v199 = vld [vmem:[%s166 + $0xc0] sm:$0xff]
      %v200 = vld [vmem:[%s166 + $0xc8] sm:$0xff]
      %v201 = vld [vmem:[%s166 + $0xd0] sm:$0xff]
      %v202 = vld [vmem:[%s166 + $0xd8] sm:$0xff]
      %v203 = vld [vmem:[%s166 + $0xe0] sm:$0xff]
      %v204 = vld [vmem:[%s166 + $0xe8] sm:$0xff]
      %v205 = vld [vmem:[%s166 + $0xf0] sm:$0xff]
      %v206 = vld [vmem:[%s166 + $0xf8] sm:$0xff]
      %v207 = vpack.c.bf16 %v176, %v175
      %v208 = vpack.c.bf16 %v178, %v177
      %v209 = vpack.c.bf16 %v180, %v179
      %v210 = vpack.c.bf16 %v182, %v181
      %v211 = vpack.c.bf16 %v184, %v183
      %v212 = vpack.c.bf16 %v186, %v185
      %v213 = vpack.c.bf16 %v188, %v187
      %v214 = vpack.c.bf16 %v190, %v189
      %v215 = vpack.c.bf16 %v192, %v191
      %v216 = vpack.c.bf16 %v194, %v193
      %v217 = vpack.c.bf16 %v196, %v195
      %v218 = vpack.c.bf16 %v198, %v197
      %v219 = vpack.c.bf16 %v200, %v199
      %v220 = vpack.c.bf16 %v202, %v201
      %v221 = vpack.c.bf16 %v204, %v203
      %v222 = vpack.c.bf16 %v206, %v205
      %v223 = vld [vmem:[%s1] sm:$0xf]
      %v224 = vld [vmem:[%s2] sm:$0x1]
      %v226 = vlaneseq
      %v227 = vshrl.u32 %v226, 7
      %v228 = vsub.s32 0, %v227
      %v229 = vrot.slane %v224, %v228
      %vm231 = vcmask 64512
      %v233 = vsel %vm231, %v207, 0
      %v236 = vsel %vm231, %v208, 0
      %v239 = vsel %vm231, %v209, 0
      %v242 = vsel %vm231, %v210, 0
      %v245 = vsel %vm231, %v211, 0
      %v248 = vsel %vm231, %v212, 0
      %v251 = vsel %vm231, %v213, 0
      %v254 = vsel %vm231, %v214, 0
      %v257 = vsel %vm231, %v215, 0
      %v260 = vsel %vm231, %v216, 0
      %v263 = vsel %vm231, %v217, 0
      %v266 = vsel %vm231, %v218, 0
      %v269 = vsel %vm231, %v219, 0
      %v272 = vsel %vm231, %v220, 0
      %v275 = vsel %vm231, %v221, 0
      %v278 = vsel %vm231, %v222, 0
      %vm280 = vcmask 1043456
      %v282 = vsel %vm280, %v223, 0
      %284 = vmatprep.subr.bf16.mxu0 0
      %285 = vmatpush1.bf16.msra.mxu0 %v282
      %286 = vmatprep.subr.bf16.mxu0 0
      %287 = vmatpush1.bf16.msra.mxu0 0
      %288 = vmatprep.subr.bf16.mxu0 0
      %289 = vmatpush1.bf16.msra.mxu0 0
      %290 = vmatprep.subr.bf16.mxu0 0
      %291 = vmatpush1.bf16.msra.mxu0 0
      %292 = vmatprep.subr.bf16.mxu0 0
      %293 = vmatpush1.bf16.msra.mxu0 0
      %294 = vmatprep.subr.bf16.mxu0 0
      %295 = vmatpush1.bf16.msra.mxu0 0
      %296 = vmatprep.subr.bf16.mxu0 0
      %297 = vmatpush1.bf16.msra.mxu0 0
      %298 = vmatprep.subr.bf16.mxu0 0
      %299 = vmatpush1.bf16.msra.mxu0 0
      %300 = vmatprep.subr.bf16.mxu0 0
      %301 = vmatpush1.bf16.msra.mxu0 0
      %302 = vmatprep.subr.bf16.mxu0 0
      %303 = vmatpush1.bf16.msra.mxu0 0
      %304 = vmatprep.subr.bf16.mxu0 0
      %305 = vmatpush1.bf16.msra.mxu0 0
      %306 = vmatprep.subr.bf16.mxu0 0
      %307 = vmatpush1.bf16.msra.mxu0 0
      %308 = vmatprep.subr.bf16.mxu0 0
      %309 = vmatpush1.bf16.msra.mxu0 0
      %310 = vmatprep.subr.bf16.mxu0 0
      %311 = vmatpush1.bf16.msra.mxu0 0
      %312 = vmatprep.subr.bf16.mxu0 0
      %313 = vmatpush1.bf16.msra.mxu0 0
      %314 = vmatprep.subr.bf16.mxu0 0
      %315 = vmatpush1.bf16.msra.mxu0 0
      %316 = vmatprep.mubr.bf16.mxu0 0
      %317 = vmatmul.mubr.bf16.gmra.mrb[0].mxu0 %v233
      %v318 = vpop.f32.mrb[0].mxu0
      %v319 = vadd.f32 %v229, %v318
      %v320 = vpop.f32.mrb[0].mxu0
      %v321 = vpop.f32.mrb[0].mxu0
      %v322 = vadd.f32 %v229, %v321
      %v323 = vpop.f32.mrb[0].mxu0
      %324 = vmatprep.mubr.bf16.mxu0 0
      %325 = vmatmul.mubr.bf16.gmra.mrb[0].mxu0 %v236
      %v326 = vpop.f32.mrb[0].mxu0
      %v327 = vadd.f32 %v229, %v326
      %v328 = vpop.f32.mrb[0].mxu0
      %v329 = vpop.f32.mrb[0].mxu0
      %v330 = vadd.f32 %v229, %v329
      %v331 = vpop.f32.mrb[0].mxu0
      %332 = vmatprep.mubr.bf16.mxu0 0
      %333 = vmatmul.mubr.bf16.gmra.mrb[0].mxu0 %v239
      %v334 = vpop.f32.mrb[0].mxu0
      %v335 = vadd.f32 %v229, %v334
      %v336 = vpop.f32.mrb[0].mxu0
      %v337 = vpop.f32.mrb[0].mxu0
      %v338 = vadd.f32 %v229, %v337
      %v339 = vpop.f32.mrb[0].mxu0
      %340 = vmatprep.mubr.bf16.mxu0 0
      %341 = vmatmul.mubr.bf16.gmra.mrb[0].mxu0 %v242
      %v342 = vpop.f32.mrb[0].mxu0
      %v343 = vadd.f32 %v229, %v342
      %v344 = vpop.f32.mrb[0].mxu0
      %v345 = vpop.f32.mrb[0].mxu0
      %v346 = vadd.f32 %v229, %v345
      %v347 = vpop.f32.mrb[0].mxu0
      %348 = vmatprep.mubr.bf16.mxu0 0
      %349 = vmatmul.mubr.bf16.gmra.mrb[0].mxu0 %v245
      %v350 = vpop.f32.mrb[0].mxu0
      %v351 = vadd.f32 %v229, %v350
      %v352 = vpop.f32.mrb[0].mxu0
      %v353 = vpop.f32.mrb[0].mxu0
      %v354 = vadd.f32 %v229, %v353
      %v355 = vpop.f32.mrb[0].mxu0
      %356 = vmatprep.mubr.bf16.mxu0 0
      %357 = vmatmul.mubr.bf16.gmra.mrb[0].mxu0 %v248
      %v358 = vpop.f32.mrb[0].mxu0
      %v359 = vadd.f32 %v229, %v358
      %v360 = vpop.f32.mrb[0].mxu0
      %v361 = vpop.f32.mrb[0].mxu0
      %v362 = vadd.f32 %v229, %v361
      %v363 = vpop.f32.mrb[0].mxu0
      %364 = vmatprep.mubr.bf16.mxu0 0
      %365 = vmatmul.mubr.bf16.gmra.mrb[0].mxu0 %v251
      %v366 = vpop.f32.mrb[0].mxu0
      %v367 = vadd.f32 %v229, %v366
      %v368 = vpop.f32.mrb[0].mxu0
      %v369 = vpop.f32.mrb[0].mxu0
      %v370 = vadd.f32 %v229, %v369
      %v371 = vpop.f32.mrb[0].mxu0
      %372 = vmatprep.mubr.bf16.mxu0 0
      %373 = vmatmul.mubr.bf16.gmra.mrb[0].mxu0 %v254
      %v374 = vpop.f32.mrb[0].mxu0
      %v375 = vadd.f32 %v229, %v374
      %v376 = vpop.f32.mrb[0].mxu0
      %v377 = vpop.f32.mrb[0].mxu0
      %v378 = vadd.f32 %v229, %v377
      %v379 = vpop.f32.mrb[0].mxu0
      %380 = vmatprep.mubr.bf16.mxu0 0
      %381 = vmatmul.mubr.bf16.gmra.mrb[0].mxu0 %v257
      %v382 = vpop.f32.mrb[0].mxu0
      %v383 = vadd.f32 %v229, %v382
      %v384 = vpop.f32.mrb[0].mxu0
      %v385 = vpop.f32.mrb[0].mxu0
      %v386 = vadd.f32 %v229, %v385
      %v387 = vpop.f32.mrb[0].mxu0
      %388 = vmatprep.mubr.bf16.mxu0 0
      %389 = vmatmul.mubr.bf16.gmra.mrb[0].mxu0 %v260
      %v390 = vpop.f32.mrb[0].mxu0
      %v391 = vadd.f32 %v229, %v390
      %v392 = vpop.f32.mrb[0].mxu0
      %v393 = vpop.f32.mrb[0].mxu0
      %v394 = vadd.f32 %v229, %v393
      %v395 = vpop.f32.mrb[0].mxu0
      %396 = vmatprep.mubr.bf16.mxu0 0
      %397 = vmatmul.mubr.bf16.gmra.mrb[0].mxu0 %v263
      %v398 = vpop.f32.mrb[0].mxu0
      %v399 = vadd.f32 %v229, %v398
      %v400 = vpop.f32.mrb[0].mxu0
      %v401 = vpop.f32.mrb[0].mxu0
      %v402 = vadd.f32 %v229, %v401
      %v403 = vpop.f32.mrb[0].mxu0
      %404 = vmatprep.mubr.bf16.mxu0 0
      %405 = vmatmul.mubr.bf16.gmra.mrb[0].mxu0 %v266
      %v406 = vpop.f32.mrb[0].mxu0
      %v407 = vadd.f32 %v229, %v406
      %v408 = vpop.f32.mrb[0].mxu0
      %v409 = vpop.f32.mrb[0].mxu0
      %v410 = vadd.f32 %v229, %v409
      %v411 = vpop.f32.mrb[0].mxu0
      %412 = vmatprep.mubr.bf16.mxu0 0
      %413 = vmatmul.mubr.bf16.gmra.mrb[0].mxu0 %v269
      %v414 = vpop.f32.mrb[0].mxu0
      %v415 = vadd.f32 %v229, %v414
      %v416 = vpop.f32.mrb[0].mxu0
      %v417 = vpop.f32.mrb[0].mxu0
      %v418 = vadd.f32 %v229, %v417
      %v419 = vpop.f32.mrb[0].mxu0
      %420 = vmatprep.mubr.bf16.mxu0 0
      %421 = vmatmul.mubr.bf16.gmra.mrb[0].mxu0 %v272
      %v422 = vpop.f32.mrb[0].mxu0
      %v423 = vadd.f32 %v229, %v422
      %v424 = vpop.f32.mrb[0].mxu0
      %v425 = vpop.f32.mrb[0].mxu0
      %v426 = vadd.f32 %v229, %v425
      %v427 = vpop.f32.mrb[0].mxu0
      %428 = vmatprep.mubr.bf16.mxu0 0
      %429 = vmatmul.mubr.bf16.gmra.mrb[0].mxu0 %v275
      %v430 = vpop.f32.mrb[0].mxu0
      %v431 = vadd.f32 %v229, %v430
      %v432 = vpop.f32.mrb[0].mxu0
      %v433 = vpop.f32.mrb[0].mxu0
      %v434 = vadd.f32 %v229, %v433
      %v435 = vpop.f32.mrb[0].mxu0
      %436 = vmatprep.mubr.bf16.mxu0 0
      %437 = vmatmul.mubr.bf16.gmra.mrb[0].mxu0 %v278
      %v438 = vpop.f32.mrb[0].mxu0
      %v439 = vadd.f32 %v229, %v438
      %v440 = vpop.f32.mrb[0].mxu0
      %v441 = vpop.f32.mrb[0].mxu0
      %v442 = vadd.f32 %v229, %v441
      %v443 = vpop.f32.mrb[0].mxu0
      %444 = vdwg.mxu0
      %vm445 = vcmask 195584
      %446 = vst.msk [vmem:[%s172] sm:$0xff] %vm445, %v319
      %447 = vst.msk [vmem:[%s172 + $0x8] sm:$0xff] %vm445, %v322
      %448 = vst.msk [vmem:[%s172 + $0x10] sm:$0xff] %vm445, %v327
      %449 = vst.msk [vmem:[%s172 + $0x18] sm:$0xff] %vm445, %v330
      %450 = vst.msk [vmem:[%s172 + $0x20] sm:$0xff] %vm445, %v335
      %451 = vst.msk [vmem:[%s172 + $0x28] sm:$0xff] %vm445, %v338
      %452 = vst.msk [vmem:[%s172 + $0x30] sm:$0xff] %vm445, %v343
      %453 = vst.msk [vmem:[%s172 + $0x38] sm:$0xff] %vm445, %v346
      %454 = vst.msk [vmem:[%s172 + $0x40] sm:$0xff] %vm445, %v351
      %455 = vst.msk [vmem:[%s172 + $0x48] sm:$0xff] %vm445, %v354
      %456 = vst.msk [vmem:[%s172 + $0x50] sm:$0xff] %vm445, %v359
      %457 = vst.msk [vmem:[%s172 + $0x58] sm:$0xff] %vm445, %v362
      %458 = vst.msk [vmem:[%s172 + $0x60] sm:$0xff] %vm445, %v367
      %459 = vst.msk [vmem:[%s172 + $0x68] sm:$0xff] %vm445, %v370
      %460 = vst.msk [vmem:[%s172 + $0x70] sm:$0xff] %vm445, %v375
      %461 = vst.msk [vmem:[%s172 + $0x78] sm:$0xff] %vm445, %v378
      %462 = vst.msk [vmem:[%s172 + $0x80] sm:$0xff] %vm445, %v383
      %463 = vst.msk [vmem:[%s172 + $0x88] sm:$0xff] %vm445, %v386
      %464 = vst.msk [vmem:[%s172 + $0x90] sm:$0xff] %vm445, %v391
      %465 = vst.msk [vmem:[%s172 + $0x98] sm:$0xff] %vm445, %v394
      %466 = vst.msk [vmem:[%s172 + $0xa0] sm:$0xff] %vm445, %v399
      %467 = vst.msk [vmem:[%s172 + $0xa8] sm:$0xff] %vm445, %v402
      %468 = vst.msk [vmem:[%s172 + $0xb0] sm:$0xff] %vm445, %v407
      %469 = vst.msk [vmem:[%s172 + $0xb8] sm:$0xff] %vm445, %v410
      %470 = vst.msk [vmem:[%s172 + $0xc0] sm:$0xff] %vm445, %v415
      %471 = vst.msk [vmem:[%s172 + $0xc8] sm:$0xff] %vm445, %v418
      %472 = vst.msk [vmem:[%s172 + $0xd0] sm:$0xff] %vm445, %v423
      %473 = vst.msk [vmem:[%s172 + $0xd8] sm:$0xff] %vm445, %v426
      %474 = vst.msk [vmem:[%s172 + $0xe0] sm:$0xff] %vm445, %v431
      %475 = vst.msk [vmem:[%s172 + $0xe8] sm:$0xff] %vm445, %v434
      %476 = vst.msk [vmem:[%s172 + $0xf0] sm:$0xff] %vm445, %v439
      %477 = vst.msk [vmem:[%s172 + $0xf8] sm:$0xff] %vm445, %v442
      %s478 = smul.u32 32, %s14
      %p479 = scmp.lt.s32.totalorder %s478, 63
      %s480 = scalar_select %p479, %s478, 63
      %s481 = smul.addr %s480, 8
      %s482 = scalar_lea.vmem %s3, %s481
      // Predicated region
      $region33: #{tpu_custom_call.1} parent=31 // pred_check
        %p483 = pneg %p100
      $region34: #{tpu_custom_call.1} parent=31 // pred_check_branch
        %485 = sbr.rel (%p483) target = $region36
      $region35: #{tpu_custom_call.1} parent=31 // pred_region
        %s486 = smul.u32 32, %s14
      $region36: #{tpu_custom_call.1} parent=31 // pred_fallthru
        _
    $region32: #{tpu_custom_call.1} parent=5 // pred_fallthru
      _
    %p487 = scmp.le.s32.totalorder 2, %s9
    // Predicated region
    $region37: #{tpu_custom_call.1} parent=5 // pred_check
      %p488 = pneg %p487
    $region38: #{tpu_custom_call.1} parent=5 // pred_check_branch
      %490 = sbr.rel (%p488) target = $region40
    $region39: #{tpu_custom_call.1} parent=5 // pred_region
      %s491 = ssub.s32 %s9, 2
      // Predicated region
      $region41: #{tpu_custom_call.1} parent=39 // pred_check
        %p492 = pneg %p106
      $region42: #{tpu_custom_call.1} parent=39 // pred_check_branch
        %494 = sbr.rel (%p492) target = $region44
      $region43: #{tpu_custom_call.1} parent=39 // pred_region
        %s495 = smul.u32 32, %s15
        %p496 = scmp.lt.s32.totalorder %s495, 63
        %s497 = scalar_select %p496, %s495, 63
        %s498 = smul.addr %s497, 8
        %s499 = scalar_lea.vmem %s3, %s498
      $region44: #{tpu_custom_call.1} parent=39 // pred_fallthru
        _
    $region40: #{tpu_custom_call.1} parent=5 // pred_fallthru
      _
  $region6: #{tpu_custom_call.1} parent=0 // loop_footer
    %s13 = sadd.s32 1, %s9
  $region7: #{tpu_custom_call.1} parent=0 // loop_footer_branch
    %8 = sbr.rel target = $region3
  $region8: #{tpu_custom_call.1} parent=0 // loop_exit
    _

</llo_original>
